<compile_context>
chip_gen: v7x
topology: tpu7x:2x2x1
jax: 0.10.0
libtpu: 0.0.40
codegen_flags: <defaults>
</compile_context>

<pallas_src>
import jax
import jax.numpy as jnp
from jax.experimental import pallas as pl
from jax.experimental.pallas import tpu as pltpu


def identity(x: jax.Array) -> jax.Array:
    """Faithful Identity.forward: no kernel, no copy, no HBM traffic."""
    return x


# ---- explicit materialized-copy path (only when a copy is truly required) ---

_MIN_KERNEL_BYTES = 1 << 20     # below ~1 MiB a kernel launch is a net loss
_MULTI_DMA_BYTES = 2 << 20      # split into multiple in-flight DMAs above this
_MAX_INFLIGHT_DMAS = 4          # all started, then all waited
_LANE_WIDTHS = (2048, 1024, 512, 256, 128)


def _lane_dense_shape(n: int):
    """Pick a (rows, lane) view with lane a multiple of 128, preferring rows>=8."""
    for lane in _LANE_WIDTHS:
        if n % lane == 0 and n // lane >= 8:
            return n // lane, lane
    for lane in _LANE_WIDTHS:
        if n % lane == 0:
            return n // lane, lane
    return None


def _chunks(rows: int, granule: int, max_chunks: int):
    """Split [0, rows) into <= max_chunks contiguous slices, granule-aligned."""
    if max_chunks <= 1 or rows <= granule:
        return [(0, rows)]
    num = min(max_chunks, pl.cdiv(rows, granule))
    step = pl.cdiv(pl.cdiv(rows, num), granule) * granule
    out = []
    start = 0
    while start < rows:
        size = min(step, rows - start)
        out.append((start, size))
        start += size
    return out


def _make_dma_copy_kernel(chunks, total_rows):
    """Direct HBM->HBM copy: a few in-flight DMAs, zero VMEM staging."""

    def kernel(x_ref, o_ref, sem):
        copies = []
        for i, (start, size) in enumerate(chunks):
            if start == 0 and size == total_rows:
                src, dst = x_ref, o_ref           # whole-ref copy
            else:
                src = x_ref.at[pl.ds(start, size)]
                dst = o_ref.at[pl.ds(start, size)]
            cp = pltpu.make_async_copy(src, dst, sem.at[i])
            cp.start()
            copies.append(cp)
        for cp in copies:                          # all in flight, now drain
            cp.wait()

    return kernel


def identity_pallas(x: jax.Array, *, force_kernel: bool = False) -> jax.Array:
    """Identity that materializes a fresh copy of `x` via HBM->HBM DMA.

    Prefer `identity` (returning the input) unless a distinct output buffer is
    genuinely required.  Below _MIN_KERNEL_BYTES the kernel path is skipped
    (launch overhead dominates) unless `force_kernel=True`.
    """
    if x.ndim == 0 or x.size == 0:
        # TODO(synk): 0-d / empty inputs are returned as-is (no separate buffer).
        return x

    itemsize = jnp.dtype(x.dtype).itemsize
    nbytes = x.size * itemsize
    if not force_kernel and nbytes < _MIN_KERNEL_BYTES:
        return x

    n = x.size
    shape2d = _lane_dense_shape(n)
    if shape2d is not None:
        rows, lane = shape2d
        flat = x.reshape(rows, lane)               # lane-dense 2D view
        granule = max(1, 32 // itemsize)           # 8 f32 / 16 bf16 / 32 int8
    else:
        rows = n
        flat = x.reshape(n)                        # flat 1D fallback
        granule = 512

    max_chunks = _MAX_INFLIGHT_DMAS if nbytes >= _MULTI_DMA_BYTES else 1
    chunks = _chunks(rows, granule, max_chunks)

    out_flat = pl.pallas_call(
        _make_dma_copy_kernel(chunks, rows),
        out_shape=jax.ShapeDtypeStruct(flat.shape, flat.dtype),
        in_specs=[pl.BlockSpec(memory_space=pl.ANY)],    # raw HBM ref, no auto-DMA
        out_specs=pl.BlockSpec(memory_space=pl.ANY),     # raw HBM ref, no auto-DMA
        scratch_shapes=[pltpu.SemaphoreType.DMA((len(chunks),))],
        cost_estimate=pl.CostEstimate(
            flops=0, transcendentals=0, bytes_accessed=2 * nbytes),
    )(flat)
    return out_flat.reshape(x.shape)


if __name__ == "__main__":
    key = jax.random.PRNGKey(0)
    # NCHW input, consistent with EfficientNet conv-style usage.
    x = jax.random.normal(key, (2, 4, 16, 16), dtype=jnp.float32)

    # Default / faithful Identity.forward: returns the input, zero HBM traffic.
    y_fast = identity(x)
    assert y_fast is x

    # Explicit materialized-copy path; force past the small-size cutoff so the
    # Pallas kernel actually runs on this small test input.
    y = identity_pallas(x, force_kernel=True)
    jax.block_until_ready(y)
    assert y.shape == x.shape, (y.shape, x.shape)
    assert y.dtype == x.dtype, (y.dtype, x.dtype)
    assert bool(jnp.all(y == x)), "Identity copy-kernel output mismatch"

    # Non-128-divisible size exercises the flat-1D DMA fallback (no silent skip).
    z = jax.random.normal(jax.random.PRNGKey(1), (3, 5, 7), dtype=jnp.float32)
    zc = identity_pallas(z, force_kernel=True)
    jax.block_until_ready(zc)
    assert zc.shape == z.shape and zc.dtype == z.dtype
    assert bool(jnp.all(zc == z)), "Identity copy-kernel (odd size) mismatch"

    print("KERNEL_OK")
</pallas_src>

<mosaic_0001>
module attributes {stable_mosaic.version = 11 : i64} {
  func.func @kernel(%arg0: memref<8x256xf32, #tpu.memory_space<any>>, %arg1: memref<8x256xf32, #tpu.memory_space<any>>, %arg2: memref<1x!tpu.dma_semaphore, #tpu.memory_space<semaphore_mem>>) attributes {dimension_semantics = [], scalar_prefetch = 0 : i64, scratch_operands = 1 : i64, tpu.core_type = #tpu.core_type<tc>} {
    %c0_i32 = arith.constant 0 : i32
    %0 = tpu.memref_slice %arg2[%c0_i32] : memref<1x!tpu.dma_semaphore, #tpu.memory_space<semaphore_mem>> -> memref<1x!tpu.dma_semaphore, #tpu.memory_space<semaphore_mem>>
    %1 = tpu.memref_squeeze %0 : memref<1x!tpu.dma_semaphore, #tpu.memory_space<semaphore_mem>> -> memref<!tpu.dma_semaphore, #tpu.memory_space<semaphore_mem>>
    tpu.enqueue_dma source(%arg0 : memref<8x256xf32, #tpu.memory_space<any>>) target(%arg1 : memref<8x256xf32, #tpu.memory_space<any>>) target_semaphore(%1 : memref<!tpu.dma_semaphore, #tpu.memory_space<semaphore_mem>>)
    %c0_i32_0 = arith.constant 0 : i32
    %2 = tpu.memref_slice %arg2[%c0_i32_0] : memref<1x!tpu.dma_semaphore, #tpu.memory_space<semaphore_mem>> -> memref<1x!tpu.dma_semaphore, #tpu.memory_space<semaphore_mem>>
    %3 = tpu.memref_squeeze %2 : memref<1x!tpu.dma_semaphore, #tpu.memory_space<semaphore_mem>> -> memref<!tpu.dma_semaphore, #tpu.memory_space<semaphore_mem>>
    tpu.wait_dma2 semaphore(%3 : memref<!tpu.dma_semaphore, #tpu.memory_space<semaphore_mem>>) src(%arg0 : memref<8x256xf32, #tpu.memory_space<any>>) dst(%arg1 : memref<8x256xf32, #tpu.memory_space<any>>)
    return
  }
}

</mosaic_0001>

<llo_original>
// kernel: tpu_custom_call.1
$region0: #{tpu_custom_call.1}
  #allocation0 [shape = 'u32[]', space=smem, size = 0x4, offset = 0x4, fixed_abs, tag = 'smem constant byte address 0x4 - core index']
  #allocation1 [shape = 'u32[144,128]{1,0:T(1,128)}', space=vmem, size = 0x12000, scoped, tag = 'internal scratch']
  #allocation2 [shape = 's32[1]{0}', space=sflag, size = 0x4, scoped, tag = 'scratch operand']
  #allocation3 [shape = 's32[]', space=sflag, size = 0x4, offset = 0, fixed_abs, tag = 'sflag constant byte address 0x0 - dummy sync flag']
  #allocation4 [shape = 'u32[0]{0}', space=smem, size = 0, offset = 0, fixed_abs, tag = 'smem constant byte address 0x0 - null']
  %s0 = inlined_call_operand.hbm [shape: f32[8,256], index: 0, kind: input, shape index: {}]
  %s1 = inlined_call_operand.hbm [shape: f32[8,256], index: 1, kind: output, shape index: {}]
  %s2 = sld [smem:[#allocation0]]
  $region2: #{tpu_custom_call.1} parent=0
    _
  %s4 = ssub.s32 1, %s2
  %s5 = scalar_select 0, %s4, %s2
  %s7 = sshll.u32 1, 14
  %s8 = sxor.u32 4294967295, %s7
  %s11 = sshll.u32 3, 24
  %s12 = sxor.u32 4294967295, %s11
  %s13 = sand.u32 0, %s12
  %s15 = sor.u32 %s13, 0
  %18 = dma.general %s0, 256, %s1, [#allocation2], [#allocation3], [#allocation4], %s15, 0
  %s19 = smul.u32 8, 1
  %s20 = smul.u32 %s19, 2
  %s21 = sshll.u32 %s20, 4
  %22 = dma.done [#allocation2], %s21
  %23 = vsyncmov [#allocation2]
  %s24 = vpop.sfrf %23
  %p25 = scmp.eq.s32.totalorder %s24, 0
  %p26 = pneg %p25
  %28 = shalt.err (%p26)

</llo_original>
